<compile_context>
chip_gen: v7x
topology: tpu7x:2x2x1
jax: 0.10.0
libtpu: 0.0.40
codegen_flags: <defaults>
</compile_context>

<pallas_src>
import math

import jax
import jax.numpy as jnp
from jax.experimental import pallas as pl
from jax.experimental.pallas import tpu as pltpu


def decoder_embedding_kernel_vmem(words_ref,     # SMEM (B*L,) int32 (scalar prefetch)
                                  clue_ref,      # VMEM (TB, 1, D)
                                  special_ref,   # VMEM (1, D)
                                  table_ref,     # VMEM (V, D)  (resident, constant block)
                                  pe_ref,        # VMEM (L, D)
                                  out_ref,       # VMEM out (TB, L+1, D)
                                  gather_buf):   # VMEM scratch (TB*L, D)
    bb = pl.program_id(0)
    TB, Lp1, D = out_ref.shape
    L = Lp1 - 1
    V = table_ref.shape[0]
    base = bb * (TB * L)

    # In-VMEM gather: one dynamic-slice load + store per row (no HBM DMAs).
    for i in range(TB * L):                              # static unroll (TB*L small)
        row = jnp.clip(words_ref[base + i], 0, V - 1)    # in-kernel clamp (scalar slot)
        gather_buf[pl.ds(i, 1), :] = table_ref[pl.ds(row, 1), :]

    # Row 0: clue + special embedding, one (TB, 1, D) store at sublane 0.
    out_ref[:, pl.ds(0, 1), :] = clue_ref[...] + special_ref[...]

    # Body: dense add with positional encoding, one (1, L, D) store per sample.
    pe = pe_ref[...]
    for t in range(TB):
        out_ref[pl.ds(t, 1), pl.ds(1, L), :] = (gather_buf[pl.ds(t * L, L), :] + pe)[None]


def decoder_embedding_kernel_hbm(words_ref,      # SMEM (B*L,) int32 (scalar prefetch)
                                 clue_ref,       # VMEM (TB, 1, D)
                                 special_ref,    # VMEM (1, D)
                                 table_hbm,      # HBM  (V, D)  (pl.ANY)
                                 pe_ref,         # VMEM (L, D)
                                 out_ref,        # VMEM out (TB, L+1, D)
                                 gather_buf,     # VMEM scratch (TB*L, D)
                                 sems):          # DMA sems (TB*L,)
    bb = pl.program_id(0)
    TB, Lp1, D = out_ref.shape
    L = Lp1 - 1
    V = table_hbm.shape[0]
    base = bb * (TB * L)

    # Issue all TB*L row-gather DMAs back-to-back so their latencies overlap.
    copies = []
    for i in range(TB * L):                              # static unroll
        row = jnp.clip(words_ref[base + i], 0, V - 1)
        cp = pltpu.make_async_copy(
            table_hbm.at[pl.ds(row, 1), :],              # (1, D) HBM slice at dynamic row
            gather_buf.at[pl.ds(i, 1), :],               # (1, D) VMEM slot
            sems.at[i])
        cp.start()
        copies.append(cp)

    # Row 0 computed while the gather DMAs are in flight.
    out_ref[:, pl.ds(0, 1), :] = clue_ref[...] + special_ref[...]

    for cp in copies:
        cp.wait()

    pe = pe_ref[...]
    for t in range(TB):
        out_ref[pl.ds(t, 1), pl.ds(1, L), :] = (gather_buf[pl.ds(t * L, L), :] + pe)[None]


def _pick_block_b(B, max_tb=8):
    # Largest divisor of B that is <= max_tb while keeping >= 2 grid steps
    # (so both v7x TensorCores get work); falls back to 1.
    best = 1
    for tb in range(1, min(B, max_tb) + 1):
        if B % tb == 0 and (B // tb >= 2 or B == 1):
            best = tb
    return best


def decoder_embedding(clue_weights, words, noun_table, special_weight, pe_full,
                      *, block_b=None, force_hbm=False,
                      vmem_table_budget_bytes=16 * 1024 * 1024):
    """Pallas implementation of DecoderEmbedding.forward.

    Out-of-range word ids are clamped to [0, V-1] (nn.Embedding would raise).
    """
    B, L = words.shape
    V, D = noun_table.shape
    pe = pe_full[:L]                                   # == self.pe[:, :x.size(1)]

    tb = _pick_block_b(B) if block_b is None else block_b
    assert B % tb == 0, "block_b must divide the batch size"
    n_blocks = B // tb

    words_flat = words.reshape(-1).astype(jnp.int32)   # (B*L,) -> small SMEM footprint
    clue3 = clue_weights[:, None, :]                   # (B,1,D) metadata reshape (no copy)

    use_vmem_table = (not force_hbm) and (V * D * 4 <= vmem_table_budget_bytes)

    if use_vmem_table:
        kernel = decoder_embedding_kernel_vmem
        table_spec = pl.BlockSpec((V, D), lambda bb, words: (0, 0))   # whole table in VMEM
        scratch = [pltpu.VMEM((tb * L, D), jnp.float32)]
    else:
        kernel = decoder_embedding_kernel_hbm
        table_spec = pl.BlockSpec(memory_space=pl.ANY)                # table stays in HBM
        scratch = [pltpu.VMEM((tb * L, D), jnp.float32),
                   pltpu.SemaphoreType.DMA((tb * L,))]

    # VMEM budget: double-buffered I/O blocks + resident table + gather scratch.
    io_block_bytes = 4 * (tb * D + D + L * D + tb * (L + 1) * D)
    table_bytes = V * D * 4 if use_vmem_table else 0
    vmem_limit = min(64 << 20,                                   # v7x physical ceiling
                     max(32 << 20,
                         2 * (io_block_bytes + table_bytes) + 4 * tb * L * D + (1 << 20)))

    out = pl.pallas_call(
        kernel,
        out_shape=jax.ShapeDtypeStruct((B, L + 1, D), jnp.float32),
        grid_spec=pltpu.PrefetchScalarGridSpec(
            num_scalar_prefetch=1,                               # words -> SMEM
            grid=(n_blocks,),
            in_specs=[
                pl.BlockSpec((tb, 1, D), lambda bb, words: (bb, 0, 0)),   # clue_weights
                pl.BlockSpec((1, D),     lambda bb, words: (0, 0)),       # special embedding
                table_spec,                                               # noun table
                pl.BlockSpec((L, D),     lambda bb, words: (0, 0)),       # positional enc
            ],
            out_specs=pl.BlockSpec((tb, L + 1, D), lambda bb, words: (bb, 0, 0)),
            scratch_shapes=scratch,
        ),
        compiler_params=pltpu.CompilerParams(
            dimension_semantics=("parallel",),
            vmem_limit_bytes=vmem_limit),
        cost_estimate=pl.CostEstimate(
            flops=B * (L + 1) * D,
            transcendentals=0,
            bytes_accessed=4 * (B * L            # words
                                + B * D          # clue
                                + D              # special
                                + L * D          # pe
                                + B * L * D      # gathered table rows
                                + B * (L + 1) * D),  # fused output
        ),
    )(words_flat, clue3, special_weight, noun_table, pe)

    return out                                         # (B, L+1, D)


def make_positional_encoding(d_model, max_len=25):
    # Matches the PyTorch PositionalEncoding buffer exactly.
    position = jnp.arange(max_len, dtype=jnp.float32)[:, None]            # (max_len, 1)
    div_term = jnp.exp(jnp.arange(0, d_model, 2, dtype=jnp.float32)
                       * (-math.log(10000.0) / d_model))                  # (d_model/2,)
    pe = jnp.zeros((max_len, d_model), jnp.float32)
    pe = pe.at[:, 0::2].set(jnp.sin(position * div_term))
    pe = pe.at[:, 1::2].set(jnp.cos(position * div_term))
    return pe


if __name__ == "__main__":
    B, L, D, V = 2, 8, 32, 16   # batch, words-per-sample, embedding_dim, noun vocab

    key = jax.random.PRNGKey(0)
    k1, k2, k3, k4 = jax.random.split(key, 4)

    # Deterministic synthetic parameters (word2vec table is frozen/pretrained
    # in the original module; here it is just deterministically initialized).
    noun_table = jax.random.normal(k1, (V, D), dtype=jnp.float32)      # noun_embedding.weight
    special_weight = jax.random.normal(k2, (1, D), dtype=jnp.float32)  # special_embeddings.weight
    pe_full = make_positional_encoding(D, max_len=25)

    # Example inputs.
    clue_weights = jax.random.normal(k3, (B, D), dtype=jnp.float32)
    words = jax.random.randint(k4, (B, L), 0, V, dtype=jnp.int32)

    # Pure-JAX reference of the PyTorch forward.
    ref_row0 = clue_weights + special_weight[0]                    # (B, D)
    ref_rest = noun_table[words] + pe_full[:L][None, :, :]         # (B, L, D)
    ref = jnp.concatenate([ref_row0[:, None, :], ref_rest], axis=1)

    # VMEM-resident-table fast path (taken for this toy vocab size).
    out = decoder_embedding(clue_weights, words, noun_table, special_weight, pe_full)
    out = jax.block_until_ready(out)
    assert out.shape == (B, L + 1, D) and out.dtype == jnp.float32
    assert jnp.allclose(out, ref, atol=1e-5, rtol=1e-5)

    # HBM-gather path (what a realistic, VMEM-exceeding vocab would use).
    out_hbm = decoder_embedding(clue_weights, words, noun_table, special_weight, pe_full,
                                force_hbm=True)
    out_hbm = jax.block_until_ready(out_hbm)
    assert jnp.allclose(out_hbm, ref, atol=1e-5, rtol=1e-5)

    print("KERNEL_OK")
</pallas_src>

<mosaic_0001>
module attributes {stable_mosaic.version = 11 : i64} {
  func.func @decoder_embedding_kernel_vmem(%arg0: i32, %arg1: memref<16xi32, #tpu.memory_space<smem>>, %arg2: memref<1x1x32xf32, #tpu.memory_space<vmem>>, %arg3: memref<1x32xf32, #tpu.memory_space<vmem>>, %arg4: memref<16x32xf32, #tpu.memory_space<vmem>>, %arg5: memref<8x32xf32, #tpu.memory_space<vmem>>, %arg6: memref<1x9x32xf32, #tpu.memory_space<vmem>>, %arg7: memref<8x32xf32, #tpu.memory_space<vmem>>) attributes {dimension_semantics = [#tpu.dimension_semantics<parallel>], iteration_bounds = array<i64: 2>, scalar_prefetch = 1 : i64, scratch_operands = 1 : i64, tpu.core_type = #tpu.core_type<tc>, window_params = [{transform_indices = @transform_0, window_bounds = array<i64: 1, 1, 32>}, {pipeline_mode = #tpu.pipeline_mode<synchronous>, transform_indices = @transform_1, window_bounds = array<i64: 1, 32>}, {pipeline_mode = #tpu.pipeline_mode<synchronous>, transform_indices = @transform_2, window_bounds = array<i64: 16, 32>}, {pipeline_mode = #tpu.pipeline_mode<synchronous>, transform_indices = @transform_3, window_bounds = array<i64: 8, 32>}, {transform_indices = @transform_4, window_bounds = array<i64: 1, 9, 32>}]} {
    %c8_i32 = arith.constant 8 : i32
    %0 = arith.muli %arg0, %c8_i32 : i32
    %c0_i32 = arith.constant 0 : i32
    %1 = arith.addi %0, %c0_i32 : i32
    %2 = arith.index_cast %1 : i32 to index
    %3 = memref.load %arg1[%2] : memref<16xi32, #tpu.memory_space<smem>>
    %c0_i32_0 = arith.constant 0 : i32
    %c15_i32 = arith.constant 15 : i32
    %4 = arith.maxsi %c0_i32_0, %3 : i32
    %5 = arith.minsi %c15_i32, %4 : i32
    %6 = arith.index_cast %5 : i32 to index
    %c0 = arith.constant 0 : index
    %7 = vector.load %arg4[%6, %c0] : memref<16x32xf32, #tpu.memory_space<vmem>>, vector<1x32xf32>
    %c0_1 = arith.constant 0 : index
    %c0_2 = arith.constant 0 : index
    %8 = vector.load %arg7[%c0_1, %c0_2] : memref<8x32xf32, #tpu.memory_space<vmem>>, vector<1x32xf32>
    tpu.vector_store %arg7[%c0_1, %c0_2], %7 {strides = array<i32>} : memref<8x32xf32, #tpu.memory_space<vmem>>, vector<1x32xf32>,
    %c1_i32 = arith.constant 1 : i32
    %9 = arith.addi %0, %c1_i32 : i32
    %10 = arith.index_cast %9 : i32 to index
    %11 = memref.load %arg1[%10] : memref<16xi32, #tpu.memory_space<smem>>
    %c0_i32_3 = arith.constant 0 : i32
    %c15_i32_4 = arith.constant 15 : i32
    %12 = arith.maxsi %c0_i32_3, %11 : i32
    %13 = arith.minsi %c15_i32_4, %12 : i32
    %14 = arith.index_cast %13 : i32 to index
    %c0_5 = arith.constant 0 : index
    %15 = vector.load %arg4[%14, %c0_5] : memref<16x32xf32, #tpu.memory_space<vmem>>, vector<1x32xf32>
    %c1 = arith.constant 1 : index
    %c0_6 = arith.constant 0 : index
    %16 = vector.load %arg7[%c1, %c0_6] : memref<8x32xf32, #tpu.memory_space<vmem>>, vector<1x32xf32>
    tpu.vector_store %arg7[%c1, %c0_6], %15 {strides = array<i32>} : memref<8x32xf32, #tpu.memory_space<vmem>>, vector<1x32xf32>,
    %c2_i32 = arith.constant 2 : i32
    %17 = arith.addi %0, %c2_i32 : i32
    %18 = arith.index_cast %17 : i32 to index
    %19 = memref.load %arg1[%18] : memref<16xi32, #tpu.memory_space<smem>>
    %c0_i32_7 = arith.constant 0 : i32
    %c15_i32_8 = arith.constant 15 : i32
    %20 = arith.maxsi %c0_i32_7, %19 : i32
    %21 = arith.minsi %c15_i32_8, %20 : i32
    %22 = arith.index_cast %21 : i32 to index
    %c0_9 = arith.constant 0 : index
    %23 = vector.load %arg4[%22, %c0_9] : memref<16x32xf32, #tpu.memory_space<vmem>>, vector<1x32xf32>
    %c2 = arith.constant 2 : index
    %c0_10 = arith.constant 0 : index
    %24 = vector.load %arg7[%c2, %c0_10] : memref<8x32xf32, #tpu.memory_space<vmem>>, vector<1x32xf32>
    tpu.vector_store %arg7[%c2, %c0_10], %23 {strides = array<i32>} : memref<8x32xf32, #tpu.memory_space<vmem>>, vector<1x32xf32>,
    %c3_i32 = arith.constant 3 : i32
    %25 = arith.addi %0, %c3_i32 : i32
    %26 = arith.index_cast %25 : i32 to index
    %27 = memref.load %arg1[%26] : memref<16xi32, #tpu.memory_space<smem>>
    %c0_i32_11 = arith.constant 0 : i32
    %c15_i32_12 = arith.constant 15 : i32
    %28 = arith.maxsi %c0_i32_11, %27 : i32
    %29 = arith.minsi %c15_i32_12, %28 : i32
    %30 = arith.index_cast %29 : i32 to index
    %c0_13 = arith.constant 0 : index
    %31 = vector.load %arg4[%30, %c0_13] : memref<16x32xf32, #tpu.memory_space<vmem>>, vector<1x32xf32>
    %c3 = arith.constant 3 : index
    %c0_14 = arith.constant 0 : index
    %32 = vector.load %arg7[%c3, %c0_14] : memref<8x32xf32, #tpu.memory_space<vmem>>, vector<1x32xf32>
    tpu.vector_store %arg7[%c3, %c0_14], %31 {strides = array<i32>} : memref<8x32xf32, #tpu.memory_space<vmem>>, vector<1x32xf32>,
    %c4_i32 = arith.constant 4 : i32
    %33 = arith.addi %0, %c4_i32 : i32
    %34 = arith.index_cast %33 : i32 to index
    %35 = memref.load %arg1[%34] : memref<16xi32, #tpu.memory_space<smem>>
    %c0_i32_15 = arith.constant 0 : i32
    %c15_i32_16 = arith.constant 15 : i32
    %36 = arith.maxsi %c0_i32_15, %35 : i32
    %37 = arith.minsi %c15_i32_16, %36 : i32
    %38 = arith.index_cast %37 : i32 to index
    %c0_17 = arith.constant 0 : index
    %39 = vector.load %arg4[%38, %c0_17] : memref<16x32xf32, #tpu.memory_space<vmem>>, vector<1x32xf32>
    %c4 = arith.constant 4 : index
    %c0_18 = arith.constant 0 : index
    %40 = vector.load %arg7[%c4, %c0_18] : memref<8x32xf32, #tpu.memory_space<vmem>>, vector<1x32xf32>
    tpu.vector_store %arg7[%c4, %c0_18], %39 {strides = array<i32>} : memref<8x32xf32, #tpu.memory_space<vmem>>, vector<1x32xf32>,
    %c5_i32 = arith.constant 5 : i32
    %41 = arith.addi %0, %c5_i32 : i32
    %42 = arith.index_cast %41 : i32 to index
    %43 = memref.load %arg1[%42] : memref<16xi32, #tpu.memory_space<smem>>
    %c0_i32_19 = arith.constant 0 : i32
    %c15_i32_20 = arith.constant 15 : i32
    %44 = arith.maxsi %c0_i32_19, %43 : i32
    %45 = arith.minsi %c15_i32_20, %44 : i32
    %46 = arith.index_cast %45 : i32 to index
    %c0_21 = arith.constant 0 : index
    %47 = vector.load %arg4[%46, %c0_21] : memref<16x32xf32, #tpu.memory_space<vmem>>, vector<1x32xf32>
    %c5 = arith.constant 5 : index
    %c0_22 = arith.constant 0 : index
    %48 = vector.load %arg7[%c5, %c0_22] : memref<8x32xf32, #tpu.memory_space<vmem>>, vector<1x32xf32>
    tpu.vector_store %arg7[%c5, %c0_22], %47 {strides = array<i32>} : memref<8x32xf32, #tpu.memory_space<vmem>>, vector<1x32xf32>,
    %c6_i32 = arith.constant 6 : i32
    %49 = arith.addi %0, %c6_i32 : i32
    %50 = arith.index_cast %49 : i32 to index
    %51 = memref.load %arg1[%50] : memref<16xi32, #tpu.memory_space<smem>>
    %c0_i32_23 = arith.constant 0 : i32
    %c15_i32_24 = arith.constant 15 : i32
    %52 = arith.maxsi %c0_i32_23, %51 : i32
    %53 = arith.minsi %c15_i32_24, %52 : i32
    %54 = arith.index_cast %53 : i32 to index
    %c0_25 = arith.constant 0 : index
    %55 = vector.load %arg4[%54, %c0_25] : memref<16x32xf32, #tpu.memory_space<vmem>>, vector<1x32xf32>
    %c6 = arith.constant 6 : index
    %c0_26 = arith.constant 0 : index
    %56 = vector.load %arg7[%c6, %c0_26] : memref<8x32xf32, #tpu.memory_space<vmem>>, vector<1x32xf32>
    tpu.vector_store %arg7[%c6, %c0_26], %55 {strides = array<i32>} : memref<8x32xf32, #tpu.memory_space<vmem>>, vector<1x32xf32>,
    %c7_i32 = arith.constant 7 : i32
    %57 = arith.addi %0, %c7_i32 : i32
    %58 = arith.index_cast %57 : i32 to index
    %59 = memref.load %arg1[%58] : memref<16xi32, #tpu.memory_space<smem>>
    %c0_i32_27 = arith.constant 0 : i32
    %c15_i32_28 = arith.constant 15 : i32
    %60 = arith.maxsi %c0_i32_27, %59 : i32
    %61 = arith.minsi %c15_i32_28, %60 : i32
    %62 = arith.index_cast %61 : i32 to index
    %c0_29 = arith.constant 0 : index
    %63 = vector.load %arg4[%62, %c0_29] : memref<16x32xf32, #tpu.memory_space<vmem>>, vector<1x32xf32>
    %c7 = arith.constant 7 : index
    %c0_30 = arith.constant 0 : index
    %64 = vector.load %arg7[%c7, %c0_30] : memref<8x32xf32, #tpu.memory_space<vmem>>, vector<1x32xf32>
    tpu.vector_store %arg7[%c7, %c0_30], %63 {strides = array<i32>} : memref<8x32xf32, #tpu.memory_space<vmem>>, vector<1x32xf32>,
    %c0_31 = arith.constant 0 : index
    %c0_32 = arith.constant 0 : index
    %c0_33 = arith.constant 0 : index
    %65 = vector.load %arg2[%c0_31, %c0_32, %c0_33] : memref<1x1x32xf32, #tpu.memory_space<vmem>>, vector<1x1x32xf32>
    %c0_34 = arith.constant 0 : index
    %c0_35 = arith.constant 0 : index
    %66 = vector.load %arg3[%c0_34, %c0_35] : memref<1x32xf32, #tpu.memory_space<vmem>>, vector<1x32xf32>
    %67 = vector.shape_cast %66 : vector<1x32xf32> to vector<1x1x32xf32>
    %68 = arith.addf %65, %67 : vector<1x1x32xf32>
    %c0_36 = arith.constant 0 : index
    %c0_37 = arith.constant 0 : index
    %c0_38 = arith.constant 0 : index
    %69 = vector.load %arg6[%c0_36, %c0_37, %c0_38] : memref<1x9x32xf32, #tpu.memory_space<vmem>>, vector<1x1x32xf32>
    tpu.vector_store %arg6[%c0_36, %c0_37, %c0_38], %68 {strides = array<i32>} : memref<1x9x32xf32, #tpu.memory_space<vmem>>, vector<1x1x32xf32>,
    %c0_39 = arith.constant 0 : index
    %c0_40 = arith.constant 0 : index
    %70 = vector.load %arg5[%c0_39, %c0_40] : memref<8x32xf32, #tpu.memory_space<vmem>>, vector<8x32xf32>
    %c0_41 = arith.constant 0 : index
    %c0_42 = arith.constant 0 : index
    %71 = vector.load %arg7[%c0_41, %c0_42] : memref<8x32xf32, #tpu.memory_space<vmem>>, vector<8x32xf32>
    %72 = arith.addf %71, %70 : vector<8x32xf32>
    %73 = vector.shape_cast %72 : vector<8x32xf32> to vector<1x8x32xf32>
    %c0_43 = arith.constant 0 : index
    %c1_44 = arith.constant 1 : index
    %c0_45 = arith.constant 0 : index
    %74 = vector.load %arg6[%c0_43, %c1_44, %c0_45] : memref<1x9x32xf32, #tpu.memory_space<vmem>>, vector<1x8x32xf32>
    tpu.vector_store %arg6[%c0_43, %c1_44, %c0_45], %73 {strides = array<i32>} : memref<1x9x32xf32, #tpu.memory_space<vmem>>, vector<1x8x32xf32>,
    return
  }
  func.func @transform_0(%arg0: i32, %arg1: memref<16xi32, #tpu.memory_space<smem>>) -> (i32, i32, i32) {
    %c0_i32 = arith.constant 0 : i32
    %c0_i32_0 = arith.constant 0 : i32
    %c0_i32_1 = arith.constant 0 : i32
    return %arg0, %c0_i32, %c0_i32_0 : i32, i32, i32
  }
  func.func @transform_1(%arg0: i32, %arg1: memref<16xi32, #tpu.memory_space<smem>>) -> (i32, i32) {
    %c0_i32 = arith.constant 0 : i32
    %c0_i32_0 = arith.constant 0 : i32
    %c0_i32_1 = arith.constant 0 : i32
    return %c0_i32, %c0_i32_0 : i32, i32
  }
  func.func @transform_2(%arg0: i32, %arg1: memref<16xi32, #tpu.memory_space<smem>>) -> (i32, i32) {
    %c0_i32 = arith.constant 0 : i32
    %c0_i32_0 = arith.constant 0 : i32
    %c0_i32_1 = arith.constant 0 : i32
    return %c0_i32, %c0_i32_0 : i32, i32
  }
  func.func @transform_3(%arg0: i32, %arg1: memref<16xi32, #tpu.memory_space<smem>>) -> (i32, i32) {
    %c0_i32 = arith.constant 0 : i32
    %c0_i32_0 = arith.constant 0 : i32
    %c0_i32_1 = arith.constant 0 : i32
    return %c0_i32, %c0_i32_0 : i32, i32
  }
  func.func @transform_4(%arg0: i32, %arg1: memref<16xi32, #tpu.memory_space<smem>>) -> (i32, i32, i32) {
    %c0_i32 = arith.constant 0 : i32
    %c0_i32_0 = arith.constant 0 : i32
    %c0_i32_1 = arith.constant 0 : i32
    return %arg0, %c0_i32, %c0_i32_0 : i32, i32, i32
  }
}

</mosaic_0001>

<llo_original>
// kernel: tpu_custom_call.1
$region0: #{tpu_custom_call.1}
  #allocation0 [shape = 'u32[]', space=smem, size = 0x4, offset = 0x4, fixed_abs, tag = 'smem constant byte address 0x4 - core index']
  #allocation1 [shape = 'u32[144,128]{1,0:T(1,128)}', space=vmem, size = 0x12000, scoped, tag = 'internal scratch']
  #allocation2 [shape = 'f32[8,32]{1,0:T(8,128)}', space=vmem, size = 0x1000, scoped, tag = 'scratch operand']
  #allocation3 [shape = 's32[1]{0}', space=sflag, size = 0x4, scoped, tag = 'scoped memory for tpu_custom_call.1']
  #allocation4 [shape = 'u8[512]{0}', space=smem, size = 0x200, scoped, tag = 'prefetched SMEM operand 0']
  %s0 = inlined_call_operand.hbm [shape: s32[16], index: 0, kind: input, shape index: {}]
  %s1 = inlined_call_operand.vmem [shape: f32[2,1,32], index: 1, kind: input, shape index: {}]
  %s2 = inlined_call_operand.vmem [shape: f32[1,32], index: 2, kind: input, shape index: {}]
  %s3 = inlined_call_operand.hbm [shape: f32[16,32], index: 3, kind: input, shape index: {}]
  %s4 = inlined_call_operand.vmem [shape: f32[8,32], index: 4, kind: input, shape index: {}]
  %s5 = inlined_call_operand.vmem [shape: f32[2,9,32], index: 5, kind: output, shape index: {}]
  %s6 = sld [smem:[#allocation0]]
  $region53: #{tpu_custom_call.1} parent=0
    _
  %s8 = ssub.s32 1, %s6
  %s9 = scalar_select 0, %s8, %s6
  %11 = dma.hbm_to_smem %s0, 16, [#allocation4], [#allocation3]
  %12 = dma.done [#allocation3], 16
  %13 = sfence
  $region1: #{tpu_custom_call.1} parent=0
    #allocation5 [shape = 'u8[8192]{0}', space=vmem, size = 0x2000, scoped, tag = 'input window, operand 3, single buffered']
    #allocation6 [shape = 's32[2]{0}', space=sflag, size = 0x8, scoped, tag = 'scoped memory for tpu_custom_call.1']
    %14 = vsyncpa [#allocation6], 0
    loop: start=0, step=1, limit=4
    $region2: #{tpu_custom_call.1} parent=1 // loop_pre_header
      _
    $region3: #{tpu_custom_call.1} parent=1 // loop_header
      %s16 = sphi 0, %s20
      %p17 = scmp.ge.s32.totalorder %s16, 4
      %s26 = sphi 0, %s28
      %s29 = sphi 0, %s26
      %s30 = sphi 0, %s29
      %s46 = sphi 0, %s30
      %s50 = sphi 0, %s50
      %s52 = sphi 0, %s50
      %s53 = sphi 0, %s52
      %s67 = sphi 0, %s53
      %s71 = sphi 0, %s71
      %s73 = sphi 0, %s71
      %s74 = sphi 0, %s73
      %s88 = sphi 0, %s74
      %s92 = sphi 0, %s92
      %s94 = sphi 0, %s92
      %s95 = sphi 0, %s94
      %s109 = sphi 0, %s95
      %s115 = sphi 0, %s117
      %s118 = sphi 0, %s115
      %s119 = sphi 0, %s118
      %s135 = sphi 0, %s119
    $region4: #{tpu_custom_call.1} parent=1 // loop_header_branch
      %19 = sbr.rel (%p17) target = $region8
    $region5: #{tpu_custom_call.1} parent=1 // loop_body
      %s21 = ssub.s32 %s16, 1
      %s22 = ssub.s32 %s16, 2
      %s23 = sadd.s32 %s16, 1
      %s24 = ssub.s32 %s16, %s23
      %p25 = scmp.eq.s32.totalorder %s24, 0
      %s27 = sadd.s32 %s26, 1
      %s28 = scalar_select %p25, %s26, %s27
      %p31 = pneg %p25
      %p32 = scmp.eq.s32.totalorder %s16, 1
      %p33 = por %p31, %p32
      %p34 = scmp.ne.s32.totalorder %s26, %s29
      %p35 = scmp.eq.s32.totalorder %s16, 0
      %p36 = por %p34, %p35
      %p37 = scmp.ne.s32.totalorder %s26, %s29
      %p38 = scmp.eq.s32.totalorder %s21, 1
      %p39 = por %p37, %p38
      %p40 = scmp.ne.s32.totalorder %s29, %s30
      %p41 = scmp.eq.s32.totalorder %s21, 0
      %p42 = por %p40, %p41
      %p43 = scmp.ne.s32.totalorder %s29, %s30
      %p44 = scmp.eq.s32.totalorder %s22, 1
      %p45 = por %p43, %p44
      %p47 = scmp.ne.s32.totalorder %s30, %s46
      %p48 = scmp.eq.s32.totalorder %s22, 0
      %p49 = por %p47, %p48
      %s51 = sadd.s32 %s50, 1
      %p54 = scmp.eq.s32.totalorder %s16, 1
      %p55 = scmp.ne.s32.totalorder %s50, %s52
      %p56 = scmp.eq.s32.totalorder %s16, 0
      %p57 = por %p55, %p56
      %p58 = scmp.ne.s32.totalorder %s50, %s52
      %p59 = scmp.eq.s32.totalorder %s21, 1
      %p60 = por %p58, %p59
      %p61 = scmp.ne.s32.totalorder %s52, %s53
      %p62 = scmp.eq.s32.totalorder %s21, 0
      %p63 = por %p61, %p62
      %p64 = scmp.ne.s32.totalorder %s52, %s53
      %p65 = scmp.eq.s32.totalorder %s22, 1
      %p66 = por %p64, %p65
      %p68 = scmp.ne.s32.totalorder %s53, %s67
      %p69 = scmp.eq.s32.totalorder %s22, 0
      %p70 = por %p68, %p69
      %s72 = sadd.s32 %s71, 1
      %p75 = scmp.eq.s32.totalorder %s16, 1
      %p76 = scmp.ne.s32.totalorder %s71, %s73
      %p77 = scmp.eq.s32.totalorder %s16, 0
      %p78 = por %p76, %p77
      %p79 = scmp.ne.s32.totalorder %s71, %s73
      %p80 = scmp.eq.s32.totalorder %s21, 1
      %p81 = por %p79, %p80
      %p82 = scmp.ne.s32.totalorder %s73, %s74
      %p83 = scmp.eq.s32.totalorder %s21, 0
      %p84 = por %p82, %p83
      %p85 = scmp.ne.s32.totalorder %s73, %s74
      %p86 = scmp.eq.s32.totalorder %s22, 1
      %p87 = por %p85, %p86
      %p89 = scmp.ne.s32.totalorder %s74, %s88
      %p90 = scmp.eq.s32.totalorder %s22, 0
      %p91 = por %p89, %p90
      %s93 = sadd.s32 %s92, 1
      %p96 = scmp.eq.s32.totalorder %s16, 1
      %p97 = scmp.ne.s32.totalorder %s92, %s94
      %p98 = scmp.eq.s32.totalorder %s16, 0
      %p99 = por %p97, %p98
      %p100 = scmp.ne.s32.totalorder %s92, %s94
      %p101 = scmp.eq.s32.totalorder %s21, 1
      %p102 = por %p100, %p101
      %p103 = scmp.ne.s32.totalorder %s94, %s95
      %p104 = scmp.eq.s32.totalorder %s21, 0
      %p105 = por %p103, %p104
      %p106 = scmp.ne.s32.totalorder %s94, %s95
      %p107 = scmp.eq.s32.totalorder %s22, 1
      %p108 = por %p106, %p107
      %p110 = scmp.ne.s32.totalorder %s95, %s109
      %p111 = scmp.eq.s32.totalorder %s22, 0
      %p112 = por %p110, %p111
      %s113 = ssub.s32 %s16, %s23
      %p114 = scmp.eq.s32.totalorder %s113, 0
      %s116 = sadd.s32 %s115, 1
      %s117 = scalar_select %p114, %s115, %s116
      %p120 = pneg %p114
      %p121 = scmp.eq.s32.totalorder %s16, 1
      %p122 = por %p120, %p121
      %p123 = scmp.ne.s32.totalorder %s115, %s118
      %p124 = scmp.eq.s32.totalorder %s16, 0
      %p125 = por %p123, %p124
      %p126 = scmp.ne.s32.totalorder %s115, %s118
      %p127 = scmp.eq.s32.totalorder %s21, 1
      %p128 = por %p126, %p127
      %p129 = scmp.ne.s32.totalorder %s118, %s119
      %p130 = scmp.eq.s32.totalorder %s21, 0
      %p131 = por %p129, %p130
      %p132 = scmp.ne.s32.totalorder %s118, %s119
      %p133 = scmp.eq.s32.totalorder %s22, 1
      %p134 = por %p132, %p133
      %p136 = scmp.ne.s32.totalorder %s119, %s135
      %p137 = scmp.eq.s32.totalorder %s22, 0
      %p138 = por %p136, %p137
      %p139 = scmp.le.s32.totalorder 1, %s16
      %p140 = scmp.lt.s32.totalorder %s16, 3
      %p141 = pnand %p139, %p140
      %p142 = pneg %p141
      // Predicated region
      $region9: #{tpu_custom_call.1} parent=5 // pred_check
        _
      $region10: #{tpu_custom_call.1} parent=5 // pred_check_branch
        %144 = sbr.rel (%p141) target = $region12
      $region11: #{tpu_custom_call.1} parent=5 // pred_region
        %s145 = ssub.s32 %s16, 1
        // Predicated region
        $region13: #{tpu_custom_call.1} parent=11 // pred_check
          %p146 = pneg %p63
        $region14: #{tpu_custom_call.1} parent=11 // pred_check_branch
          %148 = sbr.rel (%p146) target = $region16
        $region15: #{tpu_custom_call.1} parent=11 // pred_region
          _
        $region16: #{tpu_custom_call.1} parent=11 // pred_fallthru
          _
        // Predicated region
        $region17: #{tpu_custom_call.1} parent=11 // pred_check
          %p149 = pneg %p84
        $region18: #{tpu_custom_call.1} parent=11 // pred_check_branch
          %151 = sbr.rel (%p149) target = $region20
        $region19: #{tpu_custom_call.1} parent=11 // pred_region
          %s153 = ssub.s32 256, 256
          %154 = vsyncadd [#allocation6], %s153
          %s155 = sshll.u32 [#allocation5], 4
          %s156 = int_to_ptr.vmem [resolvable:$true] %s155
          %161 = dma.hbm_to_vmem [thread:$0]  %s3, 256, %s156, [#allocation6], 128, 128, 8
        $region20: #{tpu_custom_call.1} parent=11 // pred_fallthru
          _
        // Predicated region
        $region21: #{tpu_custom_call.1} parent=11 // pred_check
          %p162 = pneg %p105
        $region22: #{tpu_custom_call.1} parent=11 // pred_check_branch
          %164 = sbr.rel (%p162) target = $region24
        $region23: #{tpu_custom_call.1} parent=11 // pred_region
          _
        $region24: #{tpu_custom_call.1} parent=11 // pred_fallthru
          _
      $region12: #{tpu_custom_call.1} parent=5 // pred_fallthru
        _
      %p165 = scmp.lt.s32.totalorder %s16, 2
      // Predicated region
      $region25: #{tpu_custom_call.1} parent=5 // pred_check
        %p166 = pneg %p165
      $region26: #{tpu_custom_call.1} parent=5 // pred_check_branch
        %168 = sbr.rel (%p166) target = $region28
      $region27: #{tpu_custom_call.1} parent=5 // pred_region
        // Predicated region
        $region29: #{tpu_custom_call.1} parent=27 // pred_check
          %p169 = pneg %p36
        $region30: #{tpu_custom_call.1} parent=27 // pred_check_branch
          %171 = sbr.rel (%p169) target = $region32
        $region31: #{tpu_custom_call.1} parent=27 // pred_region
          %p172 = scmp.lt.s32.totalorder %s16, 1
          %s173 = scalar_select %p172, %s16, 1
          %s174 = scalar_lea.vmem %s1, %s173
        $region32: #{tpu_custom_call.1} parent=27 // pred_fallthru
          _
      $region28: #{tpu_custom_call.1} parent=5 // pred_fallthru
        _
      %p175 = scmp.le.s32.totalorder 1, %s16
      %p176 = scmp.lt.s32.totalorder %s16, 3
      %p177 = pnand %p175, %p176
      %p178 = pneg %p177
      // Predicated region
      $region33: #{tpu_custom_call.1} parent=5 // pred_check
        _
      $region34: #{tpu_custom_call.1} parent=5 // pred_check_branch
        %180 = sbr.rel (%p177) target = $region36
      $region35: #{tpu_custom_call.1} parent=5 // pred_region
        %s181 = ssub.s32 %s16, 1
        // Predicated region
        $region37: #{tpu_custom_call.1} parent=35 // pred_check
          %p182 = pneg %p84
        $region38: #{tpu_custom_call.1} parent=35 // pred_check_branch
          %184 = sbr.rel (%p182) target = $region40
        $region39: #{tpu_custom_call.1} parent=35 // pred_region
          %185 = dma.done [#allocation6], 256
        $region40: #{tpu_custom_call.1} parent=35 // pred_fallthru
          _
        %p186 = scmp.lt.s32.totalorder %s21, 1
        %s187 = scalar_select %p186, %s21, 1
        %s188 = scalar_lea.vmem %s1, %s187
        %p189 = pneg %p42
        %p190 = pneg %p39
        %p191 = pneg %p63
        %p192 = pneg %p60
        %p193 = pneg %p84
        %p194 = pneg %p81
        %p195 = pneg %p105
        %p196 = pneg %p102
        %p197 = pneg %p131
        %p198 = pneg %p128
        %p199 = scmp.lt.s32.totalorder %s21, 1
        %s200 = scalar_select %p199, %s21, 1
        %s201 = smul.addr %s200, 2
        %s202 = smul.addr %s201, 8
        %s203 = scalar_lea.vmem %s5, %s202
        %p204 = scmp.lt.s32.totalorder %s21, 1
        %s205 = scalar_select %p204, %s21, 1
        %s206 = scalar_lea.vmem %s1, %s205
        %p207 = scmp.lt.s32.totalorder %s21, 1
        %s208 = scalar_select %p207, %s21, 1
        %s209 = smul.addr %s208, 2
        %s210 = smul.addr %s209, 8
        %s211 = scalar_lea.vmem %s5, %s210
        %s212 = smul.u32 %s21, 8
        %s213 = sld [smem:[#allocation4 + %s212]]
        %p214 = scmp.gt.s32.totalorder %s213, 0
        %s215 = scalar_select %p214, %s213, 0
        %p216 = scmp.lt.s32.totalorder %s215, 15
        %s217 = scalar_select %p216, %s215, 15
        %s218 = scalar_lea.vmem [#allocation5], %s217
        %v219 = vld [vmem:[%s218] sm:$0x1]
        %vm220 = vcmask 253952
        %221 = vst.msk [vmem:[#allocation2] sm:$0x1] %vm220, %v219
        %s222 = sadd.s32 %s212, 1
        %s223 = sld [smem:[#allocation4 + %s222]]
        %p224 = scmp.gt.s32.totalorder %s223, 0
        %s225 = scalar_select %p224, %s223, 0
        %p226 = scmp.lt.s32.totalorder %s225, 15
        %s227 = scalar_select %p226, %s225, 15
        %s228 = scalar_lea.vmem [#allocation5], %s227
        %v229 = vld [vmem:[%s228] sm:$0x1]
        %230 = vst.msk [vmem:[#allocation2 + $0x1] sm:$0x1] %vm220, %v229
        %s231 = sadd.s32 %s212, 2
        %s232 = sld [smem:[#allocation4 + %s231]]
        %p233 = scmp.gt.s32.totalorder %s232, 0
        %s234 = scalar_select %p233, %s232, 0
        %p235 = scmp.lt.s32.totalorder %s234, 15
        %s236 = scalar_select %p235, %s234, 15
        %s237 = scalar_lea.vmem [#allocation5], %s236
        %v238 = vld [vmem:[%s237] sm:$0x1]
        %239 = vst.msk [vmem:[#allocation2 + $0x2] sm:$0x1] %vm220, %v238
        %s240 = sadd.s32 %s212, 3
        %s241 = sld [smem:[#allocation4 + %s240]]
        %p242 = scmp.gt.s32.totalorder %s241, 0
        %s243 = scalar_select %p242, %s241, 0
        %p244 = scmp.lt.s32.totalorder %s243, 15
        %s245 = scalar_select %p244, %s243, 15
        %s246 = scalar_lea.vmem [#allocation5], %s245
        %v247 = vld [vmem:[%s246] sm:$0x1]
        %248 = vst.msk [vmem:[#allocation2 + $0x3] sm:$0x1] %vm220, %v247
        %s249 = sadd.s32 %s212, 4
        %s250 = sld [smem:[#allocation4 + %s249]]
        %p251 = scmp.gt.s32.totalorder %s250, 0
        %s252 = scalar_select %p251, %s250, 0
        %p253 = scmp.lt.s32.totalorder %s252, 15
        %s254 = scalar_select %p253, %s252, 15
        %s255 = scalar_lea.vmem [#allocation5], %s254
        %v256 = vld [vmem:[%s255] sm:$0x1]
        %257 = vst.msk [vmem:[#allocation2 + $0x4] sm:$0x1] %vm220, %v256
        %s258 = sadd.s32 %s212, 5
        %s259 = sld [smem:[#allocation4 + %s258]]
        %p260 = scmp.gt.s32.totalorder %s259, 0
        %s261 = scalar_select %p260, %s259, 0
        %p262 = scmp.lt.s32.totalorder %s261, 15
        %s263 = scalar_select %p262, %s261, 15
        %s264 = scalar_lea.vmem [#allocation5], %s263
        %v265 = vld [vmem:[%s264] sm:$0x1]
        %266 = vst.msk [vmem:[#allocation2 + $0x5] sm:$0x1] %vm220, %v265
        %s267 = sadd.s32 %s212, 6
        %s268 = sld [smem:[#allocation4 + %s267]]
        %p269 = scmp.gt.s32.totalorder %s268, 0
        %s270 = scalar_select %p269, %s268, 0
        %p271 = scmp.lt.s32.totalorder %s270, 15
        %s272 = scalar_select %p271, %s270, 15
        %s273 = scalar_lea.vmem [#allocation5], %s272
        %v274 = vld [vmem:[%s273] sm:$0x1]
        %275 = vst.msk [vmem:[#allocation2 + $0x6] sm:$0x1] %vm220, %v274
        %s276 = sadd.s32 %s212, 7
        %s277 = sld [smem:[#allocation4 + %s276]]
        %p278 = scmp.gt.s32.totalorder %s277, 0
        %s279 = scalar_select %p278, %s277, 0
        %p280 = scmp.lt.s32.totalorder %s279, 15
        %s281 = scalar_select %p280, %s279, 15
        %s282 = scalar_lea.vmem [#allocation5], %s281
        %v283 = vld [vmem:[%s282] sm:$0x1]
        %284 = vst.msk [vmem:[#allocation2 + $0x7] sm:$0x1] %vm220, %v283
        %v285 = vld [vmem:[%s206] sm:$0x1]
        %v286 = vld [vmem:[%s2] sm:$0x1]
        %v287 = vadd.f32 %v285, %v286
        %288 = vst.msk [vmem:[%s211] sm:$0x1] %vm220, %v287
        %v289 = vld [vmem:[%s4] sm:$0xff]
        %v290 = vld [vmem:[#allocation2] sm:$0xff]
        %v291 = vadd.f32 %v290, %v289
        %vm292 = vcmask 261120
        %293 = vst.msk [vmem:[%s211 + $0x1] sm:$0xff] %vm292, %v291
        %p294 = scmp.lt.s32.totalorder %s21, 1
        %s295 = scalar_select %p294, %s21, 1
        %s296 = smul.addr %s295, 2
        %s297 = smul.addr %s296, 8
        %s298 = scalar_lea.vmem %s5, %s297
        // Predicated region
        $region41: #{tpu_custom_call.1} parent=35 // pred_check
          %p299 = pneg %p128
        $region42: #{tpu_custom_call.1} parent=35 // pred_check_branch
          %301 = sbr.rel (%p299) target = $region44
        $region43: #{tpu_custom_call.1} parent=35 // pred_region
          _
        $region44: #{tpu_custom_call.1} parent=35 // pred_fallthru
          _
      $region36: #{tpu_custom_call.1} parent=5 // pred_fallthru
        _
      %p302 = scmp.le.s32.totalorder 2, %s16
      // Predicated region
      $region45: #{tpu_custom_call.1} parent=5 // pred_check
        %p303 = pneg %p302
      $region46: #{tpu_custom_call.1} parent=5 // pred_check_branch
        %305 = sbr.rel (%p303) target = $region48
      $region47: #{tpu_custom_call.1} parent=5 // pred_region
        %s306 = ssub.s32 %s16, 2
        // Predicated region
        $region49: #{tpu_custom_call.1} parent=47 // pred_check
          %p307 = pneg %p134
        $region50: #{tpu_custom_call.1} parent=47 // pred_check_branch
          %309 = sbr.rel (%p307) target = $region52
        $region51: #{tpu_custom_call.1} parent=47 // pred_region
          %p310 = scmp.lt.s32.totalorder %s22, 1
          %s311 = scalar_select %p310, %s22, 1
          %s312 = smul.addr %s311, 2
          %s313 = smul.addr %s312, 8
          %s314 = scalar_lea.vmem %s5, %s313
        $region52: #{tpu_custom_call.1} parent=47 // pred_fallthru
          _
      $region48: #{tpu_custom_call.1} parent=5 // pred_fallthru
        _
    $region6: #{tpu_custom_call.1} parent=1 // loop_footer
      %s20 = sadd.s32 1, %s16
    $region7: #{tpu_custom_call.1} parent=1 // loop_footer_branch
      %15 = sbr.rel target = $region3
    $region8: #{tpu_custom_call.1} parent=1 // loop_exit
      _
    %315 = vsyncpa [#allocation6], 1
    %s316 = scalar_lea.sflag [#allocation6], 1
    %317 = vsyncpa %s316, 1

</llo_original>
